<compile_context>
chip_gen: v7x
topology: tpu7x:2x2x1
jax: 0.10.0
libtpu: 0.0.40
codegen_flags: <defaults>
</compile_context>

<pallas_src>
import functools

import jax
import jax.numpy as jnp
from jax.experimental import pallas as pl
from jax.experimental.pallas import tpu as pltpu

EMBEDDING_DIM = 32
BEST_HIDDEN1_SIZE = 512
BEST_HIDDEN2_SIZE = 64
BN_EPS = 1e-5
LANE = 128
SUBLANE = 8


def _round_up(x, m):
    return (x + m - 1) // m * m


def _mlp_kernel(x_ref, w1_ref, b1_ref, w2_ref, b2_ref, w3_ref, b3_ref, o_ref):
    """Fused 3-layer MLP; BN(eval) pre-folded into w2/b2, w3/b3; Dropout=identity.

    x arrives as f32 and is cast to bf16 in-kernel (free VPU work hidden under
    the MXU/DMA).  Matmuls run in bf16 on the MXU with f32 accumulation.
    """
    x = x_ref[...].astype(jnp.bfloat16)                       # (Bt, F)

    # Layer 1: Linear -> ReLU   (BN1 affine lives inside w2/b2)
    h = jnp.dot(x, w1_ref[...], preferred_element_type=jnp.float32) + b1_ref[...]
    h = jnp.maximum(h, 0.0)

    # Layer 2: Linear(BN1-folded, H2 zero-padded to 128) -> ReLU
    h = jnp.dot(h.astype(jnp.bfloat16), w2_ref[...],
                preferred_element_type=jnp.float32) + b2_ref[...]
    h = jnp.maximum(h, 0.0)

    # Layer 3: Linear(BN2-folded); true 32-wide output (no lane pad), so there
    # is no post-kernel slice and the writeback is only 64 B/row in bf16.
    o_ref[...] = (jnp.dot(h.astype(jnp.bfloat16), w3_ref[...],
                          preferred_element_type=jnp.float32)
                  + b3_ref[...]).astype(o_ref.dtype)
    # TODO(synk): training-mode Dropout / batch-statistics BatchNorm not
    # implemented (eval-mode semantics only).


def pack_params(p):
    """Fold eval-mode BatchNorm affines into the *following* Linear layers,
    pad H2 to a lane-dense 128, and cast matmul weights to bf16."""
    w1, b1 = p["w1"], p["b1"]
    s1, t1 = p["bn1_scale"], p["bn1_shift"]
    w2, b2 = p["w2"], p["b2"]
    s2, t2 = p["bn2_scale"], p["bn2_shift"]
    w3, b3 = p["w3"], p["b3"]

    # (h * s + t) @ W  ==  h @ (s.T * W) + (t @ W)   -- fold BN into next Linear.
    w2f = s1.reshape(-1, 1) * w2
    b2f = b2 + t1 @ w2
    w3f = s2.reshape(-1, 1) * w3
    b3f = b3 + t2 @ w3

    # Zero-pad the hidden-2 width to a multiple of 128 (lane-dense layer-2
    # activations + full-width MXU contraction in layer 3).  The padded
    # columns produce ReLU(0)=0 and the matching zero rows of w3 contribute 0.
    H2 = w2f.shape[1]
    h2_pad = _round_up(H2, LANE)
    if h2_pad != H2:
        w2f = jnp.pad(w2f, ((0, 0), (0, h2_pad - H2)))
        b2f = jnp.pad(b2f, ((0, 0), (0, h2_pad - H2)))
        w3f = jnp.pad(w3f, ((0, h2_pad - H2), (0, 0)))

    return dict(
        w1=w1.astype(jnp.bfloat16), b1=b1.astype(jnp.float32),
        w2=w2f.astype(jnp.bfloat16), b2=b2f.astype(jnp.float32),
        w3=w3f.astype(jnp.bfloat16), b3=b3f.astype(jnp.float32),
    )


def player_embedder_forward(x, kp, *, batch_tile=1024, out_dtype=jnp.bfloat16):
    """Run the fused PlayerEmbedder kernel, tiling over the batch axis.

    `kp` is the output of `pack_params` (folded, bf16, H2 lane-padded).
    Returns a (B, embedding_dim) array in `out_dtype` (bf16 by default; cast
    outside only if a downstream consumer requires f32)."""
    B, F = x.shape
    H1 = kp["w1"].shape[1]
    H2p = kp["w2"].shape[1]            # lane-padded hidden-2 width
    E = kp["w3"].shape[1]              # true embedding width (32)

    # Batch tile: as large as allowed (fills the MXU M dimension / amortizes
    # ~0.35us per grid step), but capped so the grid has >= 2 steps whenever
    # B permits, so the "parallel" axis can shard across both v7x TensorCores.
    tile = min(batch_tile, _round_up(pl.cdiv(B, 2), SUBLANE))
    tile = max(tile, SUBLANE)
    n_steps = pl.cdiv(B, tile)         # ragged last block: output writes masked

    def const_spec(shape):
        # Grid-invariant parameter block: same full block at every grid step,
        # so Pallas copies it into VMEM only once.
        return pl.BlockSpec(shape, lambda i: tuple(0 for _ in shape))

    # VMEM footprint at tile=1024: x f32 2x256KiB, out bf16 2x64KiB, weights
    # ~200KiB double-buffered, plus the (tile,512) f32 layer-1 temp (~2MiB) --
    # comfortably under every generation's scoped-VMEM default.
    out = pl.pallas_call(
        _mlp_kernel,
        out_shape=jax.ShapeDtypeStruct((B, E), out_dtype),
        grid=(n_steps,),
        in_specs=[
            pl.BlockSpec((tile, F), lambda i: (i, 0)),         # x tile (f32)
            const_spec((F, H1)), const_spec((1, H1)),          # w1, b1
            const_spec((H1, H2p)), const_spec((1, H2p)),       # w2, b2 (BN1 folded)
            const_spec((H2p, E)), const_spec((1, E)),          # w3, b3 (BN2 folded)
        ],
        out_specs=pl.BlockSpec((tile, E), lambda i: (i, 0)),
        compiler_params=pltpu.CompilerParams(
            dimension_semantics=("parallel",)),                # shards grid on v7x's 2 TCs
    )(x, kp["w1"], kp["b1"], kp["w2"], kp["b2"], kp["w3"], kp["b3"])

    return out


def init_params(key, input_size,
                embedding_dim=EMBEDDING_DIM,
                hidden1_size=BEST_HIDDEN1_SIZE,
                hidden2_size=BEST_HIDDEN2_SIZE):
    """Deterministic synthetic parameter init (shapes match the nn.Module)."""
    ks = jax.random.split(key, 12)

    def linear(kw, kb, fan_in, fan_out):
        bound = 1.0 / jnp.sqrt(fan_in)
        w = jax.random.uniform(kw, (fan_in, fan_out), jnp.float32, -bound, bound)
        b = jax.random.uniform(kb, (1, fan_out), jnp.float32, -bound, bound)
        return w, b

    def batchnorm_folded(kg, kb, km, kv, dim):
        gamma = 1.0 + 0.1 * jax.random.normal(kg, (1, dim), jnp.float32)
        beta = 0.1 * jax.random.normal(kb, (1, dim), jnp.float32)
        running_mean = 0.1 * jax.random.normal(km, (1, dim), jnp.float32)
        running_var = 1.0 + 0.1 * jax.random.uniform(kv, (1, dim), jnp.float32)
        scale = gamma / jnp.sqrt(running_var + BN_EPS)
        shift = beta - running_mean * scale
        return scale, shift

    w1, b1 = linear(ks[0], ks[1], input_size, hidden1_size)
    s1, t1 = batchnorm_folded(ks[2], ks[3], ks[4], ks[5], hidden1_size)
    w2, b2 = linear(ks[6], ks[7], hidden1_size, hidden2_size)
    s2, t2 = batchnorm_folded(ks[8], ks[9], ks[10], ks[11], hidden2_size)
    w3, b3 = linear(jax.random.fold_in(key, 100), jax.random.fold_in(key, 101),
                    hidden2_size, embedding_dim)
    return dict(w1=w1, b1=b1, bn1_scale=s1, bn1_shift=t1,
                w2=w2, b2=b2, bn2_scale=s2, bn2_shift=t2,
                w3=w3, b3=b3)


def reference_forward(x, p):
    """Pure-JAX f32 reference matching the eval-mode PyTorch forward."""
    h = jnp.maximum(x @ p["w1"] + p["b1"], 0.0) * p["bn1_scale"] + p["bn1_shift"]
    h = jnp.maximum(h @ p["w2"] + p["b2"], 0.0) * p["bn2_scale"] + p["bn2_shift"]
    return h @ p["w3"] + p["b3"]


if __name__ == "__main__":
    key = jax.random.PRNGKey(0)
    k_x, k_p = jax.random.split(key)

    B = 8            # batch (small demo size; wrapper scales to large B)
    INPUT_SIZE = 64  # player feature vector size

    x = jax.random.normal(k_x, (B, INPUT_SIZE), jnp.float32)
    params = init_params(k_p, INPUT_SIZE)
    kparams = pack_params(params)

    fwd = jax.jit(functools.partial(player_embedder_forward, batch_tile=1024))
    out = fwd(x, kparams)
    out = jax.block_until_ready(out)

    ref = reference_forward(x, params)
    assert out.shape == (B, EMBEDDING_DIM)
    # bf16 weights/activations/output with f32 accumulation -> loosened tolerance.
    assert jnp.allclose(out.astype(jnp.float32), ref, atol=5e-2, rtol=5e-2), \
        "kernel mismatch vs reference"

    print("KERNEL_OK")
</pallas_src>

<mosaic_0001>
module attributes {stable_mosaic.version = 11 : i64} {
  func.func @_mlp_kernel(%arg0: i32, %arg1: memref<8x64xf32, #tpu.memory_space<vmem>>, %arg2: memref<64x512xbf16, #tpu.memory_space<vmem>>, %arg3: memref<1x512xf32, #tpu.memory_space<vmem>>, %arg4: memref<512x128xbf16, #tpu.memory_space<vmem>>, %arg5: memref<1x128xf32, #tpu.memory_space<vmem>>, %arg6: memref<128x32xbf16, #tpu.memory_space<vmem>>, %arg7: memref<1x32xf32, #tpu.memory_space<vmem>>, %arg8: memref<8x32xbf16, #tpu.memory_space<vmem>>) attributes {dimension_semantics = [#tpu.dimension_semantics<parallel>], iteration_bounds = array<i64: 1>, scalar_prefetch = 0 : i64, scratch_operands = 0 : i64, tpu.core_type = #tpu.core_type<tc>, window_params = [{transform_indices = @transform_0, window_bounds = array<i64: 8, 64>}, {pipeline_mode = #tpu.pipeline_mode<synchronous>, transform_indices = @transform_1, window_bounds = array<i64: 64, 512>}, {pipeline_mode = #tpu.pipeline_mode<synchronous>, transform_indices = @transform_2, window_bounds = array<i64: 1, 512>}, {pipeline_mode = #tpu.pipeline_mode<synchronous>, transform_indices = @transform_3, window_bounds = array<i64: 512, 128>}, {pipeline_mode = #tpu.pipeline_mode<synchronous>, transform_indices = @transform_4, window_bounds = array<i64: 1, 128>}, {pipeline_mode = #tpu.pipeline_mode<synchronous>, transform_indices = @transform_5, window_bounds = array<i64: 128, 32>}, {pipeline_mode = #tpu.pipeline_mode<synchronous>, transform_indices = @transform_6, window_bounds = array<i64: 1, 32>}, {transform_indices = @transform_7, window_bounds = array<i64: 8, 32>}]} {
    %c0 = arith.constant 0 : index
    %c0_0 = arith.constant 0 : index
    %0 = vector.load %arg1[%c0, %c0_0] : memref<8x64xf32, #tpu.memory_space<vmem>>, vector<8x64xf32>
    %1 = arith.truncf %0 : vector<8x64xf32> to vector<8x64xbf16>
    %c0_1 = arith.constant 0 : index
    %c0_2 = arith.constant 0 : index
    %2 = vector.load %arg2[%c0_1, %c0_2] : memref<64x512xbf16, #tpu.memory_space<vmem>>, vector<64x512xbf16>
    %cst = arith.constant dense<0.000000e+00> : vector<8x512xf32>
    %3 = tpu.matmul %1, %2, %cst {dimension_numbers = #tpu.dot_dimension_numbers<[1], [0], [0], [1], [0, 0, 1, 1], [], []>} : vector<8x64xbf16>, vector<64x512xbf16>, vector<8x512xf32> -> vector<8x512xf32>
    %c0_3 = arith.constant 0 : index
    %c0_4 = arith.constant 0 : index
    %4 = vector.load %arg3[%c0_3, %c0_4] : memref<1x512xf32, #tpu.memory_space<vmem>>, vector<1x512xf32>
    %5 = vector.broadcast %4 : vector<1x512xf32> to vector<8x512xf32>
    %6 = arith.addf %3, %5 : vector<8x512xf32>
    %cst_5 = arith.constant 0.000000e+00 : f32
    %7 = vector.broadcast %cst_5 : f32 to vector<8x512xf32>
    %8 = arith.maximumf %6, %7 : vector<8x512xf32>
    %9 = arith.truncf %8 : vector<8x512xf32> to vector<8x512xbf16>
    %c0_6 = arith.constant 0 : index
    %c0_7 = arith.constant 0 : index
    %10 = vector.load %arg4[%c0_6, %c0_7] : memref<512x128xbf16, #tpu.memory_space<vmem>>, vector<512x128xbf16>
    %cst_8 = arith.constant dense<0.000000e+00> : vector<8x128xf32>
    %11 = tpu.matmul %9, %10, %cst_8 {dimension_numbers = #tpu.dot_dimension_numbers<[1], [0], [0], [1], [0, 0, 1, 1], [], []>} : vector<8x512xbf16>, vector<512x128xbf16>, vector<8x128xf32> -> vector<8x128xf32>
    %c0_9 = arith.constant 0 : index
    %c0_10 = arith.constant 0 : index
    %12 = vector.load %arg5[%c0_9, %c0_10] : memref<1x128xf32, #tpu.memory_space<vmem>>, vector<1x128xf32>
    %13 = vector.broadcast %12 : vector<1x128xf32> to vector<8x128xf32>
    %14 = arith.addf %11, %13 : vector<8x128xf32>
    %cst_11 = arith.constant 0.000000e+00 : f32
    %15 = vector.broadcast %cst_11 : f32 to vector<8x128xf32>
    %16 = arith.maximumf %14, %15 : vector<8x128xf32>
    %17 = arith.truncf %16 : vector<8x128xf32> to vector<8x128xbf16>
    %c0_12 = arith.constant 0 : index
    %c0_13 = arith.constant 0 : index
    %18 = vector.load %arg6[%c0_12, %c0_13] : memref<128x32xbf16, #tpu.memory_space<vmem>>, vector<128x32xbf16>
    %cst_14 = arith.constant dense<0.000000e+00> : vector<8x32xf32>
    %19 = tpu.matmul %17, %18, %cst_14 {dimension_numbers = #tpu.dot_dimension_numbers<[1], [0], [0], [1], [0, 0, 1, 1], [], []>} : vector<8x128xbf16>, vector<128x32xbf16>, vector<8x32xf32> -> vector<8x32xf32>
    %c0_15 = arith.constant 0 : index
    %c0_16 = arith.constant 0 : index
    %20 = vector.load %arg7[%c0_15, %c0_16] : memref<1x32xf32, #tpu.memory_space<vmem>>, vector<1x32xf32>
    %21 = vector.broadcast %20 : vector<1x32xf32> to vector<8x32xf32>
    %22 = arith.addf %19, %21 : vector<8x32xf32>
    %23 = arith.truncf %22 : vector<8x32xf32> to vector<8x32xbf16>
    %c0_17 = arith.constant 0 : index
    %c0_18 = arith.constant 0 : index
    %24 = vector.load %arg8[%c0_17, %c0_18] : memref<8x32xbf16, #tpu.memory_space<vmem>>, vector<8x32xbf16>
    tpu.vector_store %arg8[%c0_17, %c0_18], %23 {strides = array<i32>} : memref<8x32xbf16, #tpu.memory_space<vmem>>, vector<8x32xbf16>,
    return
  }
  func.func @transform_0(%arg0: i32) -> (i32, i32) {
    %c0_i32 = arith.constant 0 : i32
    %c0_i32_0 = arith.constant 0 : i32
    return %arg0, %c0_i32 : i32, i32
  }
  func.func @transform_1(%arg0: i32) -> (i32, i32) {
    %c0_i32 = arith.constant 0 : i32
    %c0_i32_0 = arith.constant 0 : i32
    %c0_i32_1 = arith.constant 0 : i32
    return %c0_i32, %c0_i32_0 : i32, i32
  }
  func.func @transform_2(%arg0: i32) -> (i32, i32) {
    %c0_i32 = arith.constant 0 : i32
    %c0_i32_0 = arith.constant 0 : i32
    %c0_i32_1 = arith.constant 0 : i32
    return %c0_i32, %c0_i32_0 : i32, i32
  }
  func.func @transform_3(%arg0: i32) -> (i32, i32) {
    %c0_i32 = arith.constant 0 : i32
    %c0_i32_0 = arith.constant 0 : i32
    %c0_i32_1 = arith.constant 0 : i32
    return %c0_i32, %c0_i32_0 : i32, i32
  }
  func.func @transform_4(%arg0: i32) -> (i32, i32) {
    %c0_i32 = arith.constant 0 : i32
    %c0_i32_0 = arith.constant 0 : i32
    %c0_i32_1 = arith.constant 0 : i32
    return %c0_i32, %c0_i32_0 : i32, i32
  }
  func.func @transform_5(%arg0: i32) -> (i32, i32) {
    %c0_i32 = arith.constant 0 : i32
    %c0_i32_0 = arith.constant 0 : i32
    %c0_i32_1 = arith.constant 0 : i32
    return %c0_i32, %c0_i32_0 : i32, i32
  }
  func.func @transform_6(%arg0: i32) -> (i32, i32) {
    %c0_i32 = arith.constant 0 : i32
    %c0_i32_0 = arith.constant 0 : i32
    %c0_i32_1 = arith.constant 0 : i32
    return %c0_i32, %c0_i32_0 : i32, i32
  }
  func.func @transform_7(%arg0: i32) -> (i32, i32) {
    %c0_i32 = arith.constant 0 : i32
    %c0_i32_0 = arith.constant 0 : i32
    return %arg0, %c0_i32 : i32, i32
  }
}

</mosaic_0001>

<llo_original>
// kernel: player_embedder_forward.1
$region0: #{player_embedder_forward.1}
  #allocation0 [shape = 'u32[]', space=smem, size = 0x4, offset = 0x4, fixed_abs, tag = 'smem constant byte address 0x4 - core index']
  #allocation1 [shape = 'u32[144,128]{1,0:T(1,128)}', space=vmem, size = 0x12000, scoped, tag = 'internal scratch']
  %s0 = inlined_call_operand.vmem [shape: f32[8,64], index: 0, kind: input, shape index: {}]
  %s1 = inlined_call_operand.hbm [shape: bf16[64,512], index: 1, kind: input, shape index: {}]
  %s2 = inlined_call_operand.vmem [shape: f32[1,512], index: 2, kind: input, shape index: {}]
  %s3 = inlined_call_operand.hbm [shape: bf16[512,128], index: 3, kind: input, shape index: {}]
  %s4 = inlined_call_operand.vmem [shape: f32[1,128], index: 4, kind: input, shape index: {}]
  %s5 = inlined_call_operand.vmem [shape: bf16[128,32], index: 5, kind: input, shape index: {}]
  %s6 = inlined_call_operand.vmem [shape: f32[1,32], index: 6, kind: input, shape index: {}]
  %s7 = inlined_call_operand.hbm [shape: bf16[8,32], index: 7, kind: output, shape index: {}]
  %s8 = sld [smem:[#allocation0]]
  $region46: #{player_embedder_forward.1} parent=0
    _
  %s10 = ssub.s32 1, %s8
  %s11 = scalar_select 0, %s10, %s8
  $region1: #{player_embedder_forward.1} parent=0
    #allocation2 [shape = 'u8[65536]{0}', space=vmem, size = 0x10000, scoped, tag = 'input window, operand 1, single buffered']
    #allocation3 [shape = 's32[1]{0}', space=sflag, size = 0x4, scoped, tag = 'scoped memory for player_embedder_forward.1']
    #allocation4 [shape = 's32[1]{0}', space=sflag, size = 0x4, scoped, tag = 'scoped memory for player_embedder_forward.1']
    #allocation5 [shape = 'u8[131072]{0}', space=vmem, size = 0x20000, scoped, tag = 'input window, operand 3, single buffered']
    #allocation6 [shape = 's32[1]{0}', space=sflag, size = 0x4, scoped, tag = 'scoped memory for player_embedder_forward.1']
    #allocation7 [shape = 'u8[2048]{0}', space=vmem, size = 0x800, scoped, tag = 'output window, operand 0, single buffered']
    %12 = vsyncpa [#allocation3], 0
    %13 = vsyncpa [#allocation6], 0
    %14 = vsyncpa [#allocation4], 0
    // Predicated region
    $region2: #{player_embedder_forward.1} parent=1 // pred_check
      _
    $region3: #{player_embedder_forward.1} parent=1 // pred_check_branch
      %16 = sbr.rel (0) target = $region5
    $region4: #{player_embedder_forward.1} parent=1 // pred_region
      _
    $region5: #{player_embedder_forward.1} parent=1 // pred_fallthru
      _
    // Predicated region
    $region6: #{player_embedder_forward.1} parent=1 // pred_check
      _
    $region7: #{player_embedder_forward.1} parent=1 // pred_check_branch
      %18 = sbr.rel (0) target = $region9
    $region8: #{player_embedder_forward.1} parent=1 // pred_region
      %s20 = ssub.s32 2048, 2048
      %21 = vsyncadd [#allocation3], %s20
      %s22 = sshll.u32 [#allocation2], 4
      %s23 = int_to_ptr.vmem [resolvable:$true] %s22
      %28 = dma.hbm_to_vmem [thread:$0]  %s1, 2048, %s23, [#allocation3], 256, 256, 16
    $region9: #{player_embedder_forward.1} parent=1 // pred_fallthru
      _
    // Predicated region
    $region10: #{player_embedder_forward.1} parent=1 // pred_check
      _
    $region11: #{player_embedder_forward.1} parent=1 // pred_check_branch
      %30 = sbr.rel (0) target = $region13
    $region12: #{player_embedder_forward.1} parent=1 // pred_region
      _
    $region13: #{player_embedder_forward.1} parent=1 // pred_fallthru
      _
    // Predicated region
    $region14: #{player_embedder_forward.1} parent=1 // pred_check
      _
    $region15: #{player_embedder_forward.1} parent=1 // pred_check_branch
      %32 = sbr.rel (0) target = $region17
    $region16: #{player_embedder_forward.1} parent=1 // pred_region
      %s34 = ssub.s32 4096, 4096
      %35 = vsyncadd [#allocation6], %s34
      %s36 = sshll.u32 [#allocation5], 4
      %s37 = int_to_ptr.vmem [resolvable:$true] %s36
      %42 = dma.hbm_to_vmem [thread:$0]  %s3, 4096, %s37, [#allocation6], 64, 64, 4
    $region17: #{player_embedder_forward.1} parent=1 // pred_fallthru
      _
    // Predicated region
    $region18: #{player_embedder_forward.1} parent=1 // pred_check
      _
    $region19: #{player_embedder_forward.1} parent=1 // pred_check_branch
      %44 = sbr.rel (0) target = $region21
    $region20: #{player_embedder_forward.1} parent=1 // pred_region
      _
    $region21: #{player_embedder_forward.1} parent=1 // pred_fallthru
      _
    // Predicated region
    $region22: #{player_embedder_forward.1} parent=1 // pred_check
      _
    $region23: #{player_embedder_forward.1} parent=1 // pred_check_branch
      %46 = sbr.rel (0) target = $region25
    $region24: #{player_embedder_forward.1} parent=1 // pred_region
      _
    $region25: #{player_embedder_forward.1} parent=1 // pred_fallthru
      _
    // Predicated region
    $region26: #{player_embedder_forward.1} parent=1 // pred_check
      _
    $region27: #{player_embedder_forward.1} parent=1 // pred_check_branch
      %48 = sbr.rel (0) target = $region29
    $region28: #{player_embedder_forward.1} parent=1 // pred_region
      _
    $region29: #{player_embedder_forward.1} parent=1 // pred_fallthru
      _
    // Predicated region
    $region30: #{player_embedder_forward.1} parent=1 // pred_check
      _
    $region31: #{player_embedder_forward.1} parent=1 // pred_check_branch
      %50 = sbr.rel (0) target = $region33
    $region32: #{player_embedder_forward.1} parent=1 // pred_region
      %51 = dma.done [#allocation3], 2048
    $region33: #{player_embedder_forward.1} parent=1 // pred_fallthru
      _
    // Predicated region
    $region34: #{player_embedder_forward.1} parent=1 // pred_check
      _
    $region35: #{player_embedder_forward.1} parent=1 // pred_check_branch
      %53 = sbr.rel (0) target = $region37
    $region36: #{player_embedder_forward.1} parent=1 // pred_region
      %54 = dma.done [#allocation6], 4096
    $region37: #{player_embedder_forward.1} parent=1 // pred_fallthru
      _
    %v56 = vld [vmem:[%s0] sm:$0xff]
    %v57 = vpack.c.bf16 %v56, %v56
    %v58 = vld [vmem:[#allocation2] sm:$0xff]
    %v59 = vld [vmem:[#allocation2 + $0x8] sm:$0xff]
    %v60 = vld [vmem:[#allocation2 + $0x10] sm:$0xff]
    %v61 = vld [vmem:[#allocation2 + $0x18] sm:$0xff]
    %v62 = vld [vmem:[#allocation2 + $0x20] sm:$0xff]
    %v63 = vld [vmem:[#allocation2 + $0x28] sm:$0xff]
    %v64 = vld [vmem:[#allocation2 + $0x30] sm:$0xff]
    %v65 = vld [vmem:[#allocation2 + $0x38] sm:$0xff]
    %v66 = vld [vmem:[#allocation2 + $0x40] sm:$0xff]
    %v67 = vld [vmem:[#allocation2 + $0x48] sm:$0xff]
    %v68 = vld [vmem:[#allocation2 + $0x50] sm:$0xff]
    %v69 = vld [vmem:[#allocation2 + $0x58] sm:$0xff]
    %v70 = vld [vmem:[#allocation2 + $0x60] sm:$0xff]
    %v71 = vld [vmem:[#allocation2 + $0x68] sm:$0xff]
    %v72 = vld [vmem:[#allocation2 + $0x70] sm:$0xff]
    %v73 = vld [vmem:[#allocation2 + $0x78] sm:$0xff]
    %v74 = vld [vmem:[%s2] sm:$0xf]
    %v76 = vlaneseq
    %v77 = vshrl.u32 %v76, 7
    %v78 = vsub.s32 0, %v77
    %v79 = vrot.slane %v74, %v78
    %v80 = vlaneseq
    %v81 = vshrl.u32 %v80, 7
    %v82 = vsub.s32 1, %v81
    %v83 = vrot.slane %v74, %v82
    %v84 = vlaneseq
    %v85 = vshrl.u32 %v84, 7
    %v86 = vsub.s32 2, %v85
    %v87 = vrot.slane %v74, %v86
    %v88 = vlaneseq
    %v89 = vshrl.u32 %v88, 7
    %v90 = vsub.s32 3, %v89
    %v91 = vrot.slane %v74, %v90
    %v112 = vunpack.c.l.b16 %v58
    %v113 = vunpack.c.h.b16 %v58
    %v114 = vunpack.c.l.b16 %v59
    %v115 = vunpack.c.h.b16 %v59
    %v116 = vunpack.c.l.b16 %v60
    %v117 = vunpack.c.h.b16 %v60
    %v118 = vunpack.c.l.b16 %v61
    %v119 = vunpack.c.h.b16 %v61
    %v120 = vunpack.c.l.b16 %v62
    %v121 = vunpack.c.h.b16 %v62
    %v122 = vunpack.c.l.b16 %v63
    %v123 = vunpack.c.h.b16 %v63
    %v124 = vunpack.c.l.b16 %v64
    %v125 = vunpack.c.h.b16 %v64
    %v126 = vunpack.c.l.b16 %v65
    %v127 = vunpack.c.h.b16 %v65
    %v128 = vunpack.c.l.b16 %v66
    %v129 = vunpack.c.h.b16 %v66
    %v130 = vunpack.c.l.b16 %v67
    %v131 = vunpack.c.h.b16 %v67
    %v132 = vunpack.c.l.b16 %v68
    %v133 = vunpack.c.h.b16 %v68
    %v134 = vunpack.c.l.b16 %v69
    %v135 = vunpack.c.h.b16 %v69
    %v136 = vunpack.c.l.b16 %v70
    %v137 = vunpack.c.h.b16 %v70
    %v138 = vunpack.c.l.b16 %v71
    %v139 = vunpack.c.h.b16 %v71
    %v140 = vunpack.c.l.b16 %v72
    %v141 = vunpack.c.h.b16 %v72
    %v142 = vunpack.c.l.b16 %v73
    %v143 = vunpack.c.h.b16 %v73
    %v144 = vpack.c.b16 %v116, %v112
    %v145 = vpack.c.b16 %v117, %v113
    %v146 = vpack.c.b16 %v118, %v114
    %v147 = vpack.c.b16 %v119, %v115
    %v148 = vpack.c.b16 %v124, %v120
    %v149 = vpack.c.b16 %v125, %v121
    %v150 = vpack.c.b16 %v126, %v122
    %v151 = vpack.c.b16 %v127, %v123
    %v152 = vpack.c.b16 %v132, %v128
    %v153 = vpack.c.b16 %v133, %v129
    %v154 = vpack.c.b16 %v134, %v130
    %v155 = vpack.c.b16 %v135, %v131
    %v156 = vpack.c.b16 %v140, %v136
    %v157 = vpack.c.b16 %v141, %v137
    %v158 = vpack.c.b16 %v142, %v138
    %v159 = vpack.c.b16 %v143, %v139
    %vm176 = vcmask 523264
    %v178 = vsel %vm176, %v57, 0
    %180 = vmatprep.subr.bf16.mxu0 %v145
    %181 = vmatpush1.bf16.msra.mxu0 %v144
    %182 = vmatprep.subr.bf16.mxu0 %v149
    %183 = vmatpush1.bf16.msra.mxu0 %v148
    %184 = vmatprep.subr.bf16.mxu0 %v153
    %185 = vmatpush1.bf16.msra.mxu0 %v152
    %186 = vmatprep.subr.bf16.mxu0 %v157
    %187 = vmatpush1.bf16.msra.mxu0 %v156
    %188 = vmatprep.subr.bf16.mxu0 0
    %189 = vmatpush1.bf16.msra.mxu0 0
    %190 = vmatprep.subr.bf16.mxu0 0
    %191 = vmatpush1.bf16.msra.mxu0 0
    %192 = vmatprep.subr.bf16.mxu0 0
    %193 = vmatpush1.bf16.msra.mxu0 0
    %194 = vmatprep.subr.bf16.mxu0 0
    %195 = vmatpush1.bf16.msra.mxu0 0
    %196 = vmatprep.subr.bf16.mxu0 0
    %197 = vmatpush1.bf16.msra.mxu0 0
    %198 = vmatprep.subr.bf16.mxu0 0
    %199 = vmatpush1.bf16.msra.mxu0 0
    %200 = vmatprep.subr.bf16.mxu0 0
    %201 = vmatpush1.bf16.msra.mxu0 0
    %202 = vmatprep.subr.bf16.mxu0 0
    %203 = vmatpush1.bf16.msra.mxu0 0
    %204 = vmatprep.subr.bf16.mxu0 0
    %205 = vmatpush1.bf16.msra.mxu0 0
    %206 = vmatprep.subr.bf16.mxu0 0
    %207 = vmatpush1.bf16.msra.mxu0 0
    %208 = vmatprep.subr.bf16.mxu0 0
    %209 = vmatpush1.bf16.msra.mxu0 0
    %210 = vmatprep.subr.bf16.mxu0 0
    %211 = vmatpush1.bf16.msra.mxu0 0
    %212 = vmatprep.mubr.bf16.mxu0 0
    %213 = vmatmul.mubr.bf16.gmra.mrb[0].mxu0 %v178
    %v214 = vpop.f32.mrb[0].mxu0
    %v215 = vadd.f32 %v79, %v214
    %v216 = vpop.f32.mrb[0].mxu0
    %v217 = vadd.f32 %v83, %v216
    %v218 = vpop.f32.mrb[0].mxu0
    %v219 = vpop.f32.mrb[0].mxu0
    %220 = vdwg.mxu0
    %221 = vmatprep.subr.bf16.mxu0 %v147
    %222 = vmatpush1.bf16.msra.mxu0 %v146
    %223 = vmatprep.subr.bf16.mxu0 %v151
    %224 = vmatpush1.bf16.msra.mxu0 %v150
    %225 = vmatprep.subr.bf16.mxu0 %v155
    %226 = vmatpush1.bf16.msra.mxu0 %v154
    %227 = vmatprep.subr.bf16.mxu0 %v159
    %228 = vmatpush1.bf16.msra.mxu0 %v158
    %229 = vmatprep.subr.bf16.mxu0 0
    %230 = vmatpush1.bf16.msra.mxu0 0
    %231 = vmatprep.subr.bf16.mxu0 0
    %232 = vmatpush1.bf16.msra.mxu0 0
    %233 = vmatprep.subr.bf16.mxu0 0
    %234 = vmatpush1.bf16.msra.mxu0 0
    %235 = vmatprep.subr.bf16.mxu0 0
    %236 = vmatpush1.bf16.msra.mxu0 0
    %237 = vmatprep.subr.bf16.mxu0 0
    %238 = vmatpush1.bf16.msra.mxu0 0
    %239 = vmatprep.subr.bf16.mxu0 0
    %240 = vmatpush1.bf16.msra.mxu0 0
    %241 = vmatprep.subr.bf16.mxu0 0
    %242 = vmatpush1.bf16.msra.mxu0 0
    %243 = vmatprep.subr.bf16.mxu0 0
    %244 = vmatpush1.bf16.msra.mxu0 0
    %245 = vmatprep.subr.bf16.mxu0 0
    %246 = vmatpush1.bf16.msra.mxu0 0
    %247 = vmatprep.subr.bf16.mxu0 0
    %248 = vmatpush1.bf16.msra.mxu0 0
    %249 = vmatprep.subr.bf16.mxu0 0
    %250 = vmatpush1.bf16.msra.mxu0 0
    %251 = vmatprep.subr.bf16.mxu0 0
    %252 = vmatpush1.bf16.msra.mxu0 0
    %253 = vmatprep.mubr.bf16.mxu0 0
    %254 = vmatmul.mubr.bf16.gmra.mrb[0].mxu0 %v178
    %v255 = vpop.f32.mrb[0].mxu0
    %v256 = vadd.f32 %v87, %v255
    %v257 = vpop.f32.mrb[0].mxu0
    %v258 = vadd.f32 %v91, %v257
    %v259 = vpop.f32.mrb[0].mxu0
    %v260 = vpop.f32.mrb[0].mxu0
    %261 = vdwg.mxu0
    %v262 = vmax.f32 %v215, 0.0
    %v263 = vmax.f32 %v217, 0.0
    %v264 = vmax.f32 %v256, 0.0
    %v265 = vmax.f32 %v258, 0.0
    %v266 = vpack.c.bf16 %v262, %v262
    %v267 = vpack.c.bf16 %v263, %v263
    %v268 = vpack.c.bf16 %v264, %v264
    %v269 = vpack.c.bf16 %v265, %v265
    %v270 = vld [vmem:[#allocation5] sm:$0xf]
    %v271 = vld [vmem:[#allocation5 + $0x4] sm:$0xf]
    %v272 = vld [vmem:[#allocation5 + $0x8] sm:$0xf]
    %v273 = vld [vmem:[#allocation5 + $0xc] sm:$0xf]
    %v274 = vld [vmem:[#allocation5 + $0x10] sm:$0xf]
    %v275 = vld [vmem:[#allocation5 + $0x14] sm:$0xf]
    %v276 = vld [vmem:[#allocation5 + $0x18] sm:$0xf]
    %v277 = vld [vmem:[#allocation5 + $0x1c] sm:$0xf]
    %v278 = vld [vmem:[#allocation5 + $0x20] sm:$0xf]
    %v279 = vld [vmem:[#allocation5 + $0x24] sm:$0xf]
    %v280 = vld [vmem:[#allocation5 + $0x28] sm:$0xf]
    %v281 = vld [vmem:[#allocation5 + $0x2c] sm:$0xf]
    %v282 = vld [vmem:[#allocation5 + $0x30] sm:$0xf]
    %v283 = vld [vmem:[#allocation5 + $0x34] sm:$0xf]
    %v284 = vld [vmem:[#allocation5 + $0x38] sm:$0xf]
    %v285 = vld [vmem:[#allocation5 + $0x3c] sm:$0xf]
    %v286 = vld [vmem:[#allocation5 + $0x40] sm:$0xf]
    %v287 = vld [vmem:[#allocation5 + $0x44] sm:$0xf]
    %v288 = vld [vmem:[#allocation5 + $0x48] sm:$0xf]
    %v289 = vld [vmem:[#allocation5 + $0x4c] sm:$0xf]
    %v290 = vld [vmem:[#allocation5 + $0x50] sm:$0xf]
    %v291 = vld [vmem:[#allocation5 + $0x54] sm:$0xf]
    %v292 = vld [vmem:[#allocation5 + $0x58] sm:$0xf]
    %v293 = vld [vmem:[#allocation5 + $0x5c] sm:$0xf]
    %v294 = vld [vmem:[#allocation5 + $0x60] sm:$0xf]
    %v295 = vld [vmem:[#allocation5 + $0x64] sm:$0xf]
    %v296 = vld [vmem:[#allocation5 + $0x68] sm:$0xf]
    %v297 = vld [vmem:[#allocation5 + $0x6c] sm:$0xf]
    %v298 = vld [vmem:[#allocation5 + $0x70] sm:$0xf]
    %v299 = vld [vmem:[#allocation5 + $0x74] sm:$0xf]
    %v300 = vld [vmem:[#allocation5 + $0x78] sm:$0xf]
    %v301 = vld [vmem:[#allocation5 + $0x7c] sm:$0xf]
    %v302 = vld [vmem:[#allocation5 + $0x80] sm:$0xf]
    %v303 = vld [vmem:[#allocation5 + $0x84] sm:$0xf]
    %v304 = vld [vmem:[#allocation5 + $0x88] sm:$0xf]
    %v305 = vld [vmem:[#allocation5 + $0x8c] sm:$0xf]
    %v306 = vld [vmem:[#allocation5 + $0x90] sm:$0xf]
    %v307 = vld [vmem:[#allocation5 + $0x94] sm:$0xf]
    %v308 = vld [vmem:[#allocation5 + $0x98] sm:$0xf]
    %v309 = vld [vmem:[#allocation5 + $0x9c] sm:$0xf]
    %v310 = vld [vmem:[#allocation5 + $0xa0] sm:$0xf]
    %v311 = vld [vmem:[#allocation5 + $0xa4] sm:$0xf]
    %v312 = vld [vmem:[#allocation5 + $0xa8] sm:$0xf]
    %v313 = vld [vmem:[#allocation5 + $0xac] sm:$0xf]
    %v314 = vld [vmem:[#allocation5 + $0xb0] sm:$0xf]
    %v315 = vld [vmem:[#allocation5 + $0xb4] sm:$0xf]
    %v316 = vld [vmem:[#allocation5 + $0xb8] sm:$0xf]
    %v317 = vld [vmem:[#allocation5 + $0xbc] sm:$0xf]
    %v318 = vld [vmem:[#allocation5 + $0xc0] sm:$0xf]
    %v319 = vld [vmem:[#allocation5 + $0xc4] sm:$0xf]
    %v320 = vld [vmem:[#allocation5 + $0xc8] sm:$0xf]
    %v321 = vld [vmem:[#allocation5 + $0xcc] sm:$0xf]
    %v322 = vld [vmem:[#allocation5 + $0xd0] sm:$0xf]
    %v323 = vld [vmem:[#allocation5 + $0xd4] sm:$0xf]
    %v324 = vld [vmem:[#allocation5 + $0xd8] sm:$0xf]
    %v325 = vld [vmem:[#allocation5 + $0xdc] sm:$0xf]
    %v326 = vld [vmem:[#allocation5 + $0xe0] sm:$0xf]
    %v327 = vld [vmem:[#allocation5 + $0xe4] sm:$0xf]
    %v328 = vld [vmem:[#allocation5 + $0xe8] sm:$0xf]
    %v329 = vld [vmem:[#allocation5 + $0xec] sm:$0xf]
    %v330 = vld [vmem:[#allocation5 + $0xf0] sm:$0xf]
    %v331 = vld [vmem:[#allocation5 + $0xf4] sm:$0xf]
    %v332 = vld [vmem:[#allocation5 + $0xf8] sm:$0xf]
    %v333 = vld [vmem:[#allocation5 + $0xfc] sm:$0xf]
    %v334 = vld [vmem:[%s4] sm:$0x1]
    %v336 = vlaneseq
    %v337 = vshrl.u32 %v336, 7
    %v338 = vsub.s32 0, %v337
    %v339 = vrot.slane %v334, %v338
    %v405 = vunpack.c.l.b16 %v270
    %v406 = vunpack.c.l.b16 %v271
    %v407 = vunpack.c.l.b16 %v272
    %v408 = vunpack.c.l.b16 %v273
    %v409 = vunpack.c.l.b16 %v274
    %v410 = vunpack.c.l.b16 %v275
    %v411 = vunpack.c.l.b16 %v276
    %v412 = vunpack.c.l.b16 %v277
    %v413 = vunpack.c.l.b16 %v278
    %v414 = vunpack.c.l.b16 %v279
    %v415 = vunpack.c.l.b16 %v280
    %v416 = vunpack.c.l.b16 %v281
    %v417 = vunpack.c.l.b16 %v282
    %v418 = vunpack.c.l.b16 %v283
    %v419 = vunpack.c.l.b16 %v284
    %v420 = vunpack.c.l.b16 %v285
    %v421 = vunpack.c.l.b16 %v286
    %v422 = vunpack.c.l.b16 %v287
    %v423 = vunpack.c.l.b16 %v288
    %v424 = vunpack.c.l.b16 %v289
    %v425 = vunpack.c.l.b16 %v290
    %v426 = vunpack.c.l.b16 %v291
    %v427 = vunpack.c.l.b16 %v292
    %v428 = vunpack.c.l.b16 %v293
    %v429 = vunpack.c.l.b16 %v294
    %v430 = vunpack.c.l.b16 %v295
    %v431 = vunpack.c.l.b16 %v296
    %v432 = vunpack.c.l.b16 %v297
    %v433 = vunpack.c.l.b16 %v298
    %v434 = vunpack.c.l.b16 %v299
    %v435 = vunpack.c.l.b16 %v300
    %v436 = vunpack.c.l.b16 %v301
    %v437 = vunpack.c.l.b16 %v302
    %v438 = vunpack.c.l.b16 %v303
    %v439 = vunpack.c.l.b16 %v304
    %v440 = vunpack.c.l.b16 %v305
    %v441 = vunpack.c.l.b16 %v306
    %v442 = vunpack.c.l.b16 %v307
    %v443 = vunpack.c.l.b16 %v308
    %v444 = vunpack.c.l.b16 %v309
    %v445 = vunpack.c.l.b16 %v310
    %v446 = vunpack.c.l.b16 %v311
    %v447 = vunpack.c.l.b16 %v312
    %v448 = vunpack.c.l.b16 %v313
    %v449 = vunpack.c.l.b16 %v314
    %v450 = vunpack.c.l.b16 %v315
    %v451 = vunpack.c.l.b16 %v316
    %v452 = vunpack.c.l.b16 %v317
    %v453 = vunpack.c.l.b16 %v318
    %v454 = vunpack.c.l.b16 %v319
    %v455 = vunpack.c.l.b16 %v320
    %v456 = vunpack.c.l.b16 %v321
    %v457 = vunpack.c.l.b16 %v322
    %v458 = vunpack.c.l.b16 %v323
    %v459 = vunpack.c.l.b16 %v324
    %v460 = vunpack.c.l.b16 %v325
    %v461 = vunpack.c.l.b16 %v326
    %v462 = vunpack.c.l.b16 %v327
    %v463 = vunpack.c.l.b16 %v328
    %v464 = vunpack.c.l.b16 %v329
    %v465 = vunpack.c.l.b16 %v330
    %v466 = vunpack.c.l.b16 %v331
    %v467 = vunpack.c.l.b16 %v332
    %v468 = vunpack.c.l.b16 %v333
    %v469 = vpack.c.b16 %v406, %v405
    %v470 = vpack.c.b16 %v408, %v407
    %v471 = vpack.c.b16 %v410, %v409
    %v472 = vpack.c.b16 %v412, %v411
    %v473 = vpack.c.b16 %v414, %v413
    %v474 = vpack.c.b16 %v416, %v415
    %v475 = vpack.c.b16 %v418, %v417
    %v476 = vpack.c.b16 %v420, %v419
    %v477 = vpack.c.b16 %v422, %v421
    %v478 = vpack.c.b16 %v424, %v423
    %v479 = vpack.c.b16 %v426, %v425
    %v480 = vpack.c.b16 %v428, %v427
    %v481 = vpack.c.b16 %v430, %v429
    %v482 = vpack.c.b16 %v432, %v431
    %v483 = vpack.c.b16 %v434, %v433
    %v484 = vpack.c.b16 %v436, %v435
    %v485 = vpack.c.b16 %v438, %v437
    %v486 = vpack.c.b16 %v440, %v439
    %v487 = vpack.c.b16 %v442, %v441
    %v488 = vpack.c.b16 %v444, %v443
    %v489 = vpack.c.b16 %v446, %v445
    %v490 = vpack.c.b16 %v448, %v447
    %v491 = vpack.c.b16 %v450, %v449
    %v492 = vpack.c.b16 %v452, %v451
    %v493 = vpack.c.b16 %v454, %v453
    %v494 = vpack.c.b16 %v456, %v455
    %v495 = vpack.c.b16 %v458, %v457
    %v496 = vpack.c.b16 %v460, %v459
    %v497 = vpack.c.b16 %v462, %v461
    %v498 = vpack.c.b16 %v464, %v463
    %v499 = vpack.c.b16 %v466, %v465
    %v500 = vpack.c.b16 %v468, %v467
    %533 = vmatprep.subr.bf16.mxu0 0
    %534 = vmatpush1.bf16.msra.mxu0 %v469
    %535 = vmatprep.subr.bf16.mxu0 0
    %536 = vmatpush1.bf16.msra.mxu0 %v470
    %537 = vmatprep.subr.bf16.mxu0 0
    %538 = vmatpush1.bf16.msra.mxu0 %v471
    %539 = vmatprep.subr.bf16.mxu0 0
    %540 = vmatpush1.bf16.msra.mxu0 %v472
    %541 = vmatprep.subr.bf16.mxu0 0
    %542 = vmatpush1.bf16.msra.mxu0 %v473
    %543 = vmatprep.subr.bf16.mxu0 0
    %544 = vmatpush1.bf16.msra.mxu0 %v474
    %545 = vmatprep.subr.bf16.mxu0 0
    %546 = vmatpush1.bf16.msra.mxu0 %v475
    %547 = vmatprep.subr.bf16.mxu0 0
    %548 = vmatpush1.bf16.msra.mxu0 %v476
    %549 = vmatprep.subr.bf16.mxu0 0
    %550 = vmatpush1.bf16.msra.mxu0 %v477
    %551 = vmatprep.subr.bf16.mxu0 0
    %552 = vmatpush1.bf16.msra.mxu0 %v478
    %553 = vmatprep.subr.bf16.mxu0 0
    %554 = vmatpush1.bf16.msra.mxu0 %v479
    %555 = vmatprep.subr.bf16.mxu0 0
    %556 = vmatpush1.bf16.msra.mxu0 %v480
    %557 = vmatprep.subr.bf16.mxu0 0
    %558 = vmatpush1.bf16.msra.mxu0 %v481
    %559 = vmatprep.subr.bf16.mxu0 0
    %560 = vmatpush1.bf16.msra.mxu0 %v482
    %561 = vmatprep.subr.bf16.mxu0 0
    %562 = vmatpush1.bf16.msra.mxu0 %v483
    %563 = vmatprep.subr.bf16.mxu0 0
    %564 = vmatpush1.bf16.msra.mxu0 %v484
    %565 = vmatprep.mubr.bf16.mxu0 %v267
    %566 = vmatmul.mubr.bf16.gmra.mrb[0].mxu0 %v266
    %v567 = vpop.f32.mrb[0].mxu0
    %v568 = vadd.f32 %v339, %v567
    %v569 = vpop.f32.mrb[0].mxu0
    %v570 = vpop.f32.mrb[0].mxu0
    %v571 = vpop.f32.mrb[0].mxu0
    %572 = vdwg.mxu0
    %573 = vmatprep.subr.bf16.mxu0 0
    %574 = vmatpush1.bf16.msra.mxu0 %v485
    %575 = vmatprep.subr.bf16.mxu0 0
    %576 = vmatpush1.bf16.msra.mxu0 %v486
    %577 = vmatprep.subr.bf16.mxu0 0
    %578 = vmatpush1.bf16.msra.mxu0 %v487
    %579 = vmatprep.subr.bf16.mxu0 0
    %580 = vmatpush1.bf16.msra.mxu0 %v488
    %581 = vmatprep.subr.bf16.mxu0 0
    %582 = vmatpush1.bf16.msra.mxu0 %v489
    %583 = vmatprep.subr.bf16.mxu0 0
    %584 = vmatpush1.bf16.msra.mxu0 %v490
    %585 = vmatprep.subr.bf16.mxu0 0
    %586 = vmatpush1.bf16.msra.mxu0 %v491
    %587 = vmatprep.subr.bf16.mxu0 0
    %588 = vmatpush1.bf16.msra.mxu0 %v492
    %589 = vmatprep.subr.bf16.mxu0 0
    %590 = vmatpush1.bf16.msra.mxu0 %v493
    %591 = vmatprep.subr.bf16.mxu0 0
    %592 = vmatpush1.bf16.msra.mxu0 %v494
    %593 = vmatprep.subr.bf16.mxu0 0
    %594 = vmatpush1.bf16.msra.mxu0 %v495
    %595 = vmatprep.subr.bf16.mxu0 0
    %596 = vmatpush1.bf16.msra.mxu0 %v496
    %597 = vmatprep.subr.bf16.mxu0 0
    %598 = vmatpush1.bf16.msra.mxu0 %v497
    %599 = vmatprep.subr.bf16.mxu0 0
    %600 = vmatpush1.bf16.msra.mxu0 %v498
    %601 = vmatprep.subr.bf16.mxu0 0
    %602 = vmatpush1.bf16.msra.mxu0 %v499
    %603 = vmatprep.subr.bf16.mxu0 0
    %604 = vmatpush1.bf16.msra.mxu0 %v500
    %605 = vmatprep.mubr.bf16.mxu0 %v269
    %606 = vmatmul.mubr.bf16.gmra.mrb[0].mxu0 %v268
    %v607 = vpop.f32.mrb[0].mxu0
    %v608 = vadd.f32 %v568, %v607
    %v609 = vpop.f32.mrb[0].mxu0
    %v610 = vpop.f32.mrb[0].mxu0
    %v611 = vpop.f32.mrb[0].mxu0
    %612 = vdwg.mxu0
    %v613 = vmax.f32 %v608, 0.0
    %v614 = vpack.c.bf16 %v613, %v613
    %v615 = vld [vmem:[%s5] sm:$0xf]
    %v616 = vld [vmem:[%s5 + $0x4] sm:$0xf]
    %v617 = vld [vmem:[%s5 + $0x8] sm:$0xf]
    %v618 = vld [vmem:[%s5 + $0xc] sm:$0xf]
    %v619 = vld [vmem:[%s5 + $0x10] sm:$0xf]
    %v620 = vld [vmem:[%s5 + $0x14] sm:$0xf]
    %v621 = vld [vmem:[%s5 + $0x18] sm:$0xf]
    %v622 = vld [vmem:[%s5 + $0x1c] sm:$0xf]
    %v623 = vld [vmem:[%s5 + $0x20] sm:$0xf]
    %v624 = vld [vmem:[%s5 + $0x24] sm:$0xf]
    %v625 = vld [vmem:[%s5 + $0x28] sm:$0xf]
    %v626 = vld [vmem:[%s5 + $0x2c] sm:$0xf]
    %v627 = vld [vmem:[%s5 + $0x30] sm:$0xf]
    %v628 = vld [vmem:[%s5 + $0x34] sm:$0xf]
    %v629 = vld [vmem:[%s5 + $0x38] sm:$0xf]
    %v630 = vld [vmem:[%s5 + $0x3c] sm:$0xf]
    %v631 = vld [vmem:[%s6] sm:$0x1]
    %v633 = vlaneseq
    %v634 = vshrl.u32 %v633, 7
    %v635 = vsub.s32 0, %v634
    %v636 = vrot.slane %v631, %v635
    %v654 = vunpack.c.l.b16 %v615
    %v655 = vunpack.c.l.b16 %v616
    %v656 = vunpack.c.l.b16 %v617
    %v657 = vunpack.c.l.b16 %v618
    %v658 = vunpack.c.l.b16 %v619
    %v659 = vunpack.c.l.b16 %v620
    %v660 = vunpack.c.l.b16 %v621
    %v661 = vunpack.c.l.b16 %v622
    %v662 = vunpack.c.l.b16 %v623
    %v663 = vunpack.c.l.b16 %v624
    %v664 = vunpack.c.l.b16 %v625
    %v665 = vunpack.c.l.b16 %v626
    %v666 = vunpack.c.l.b16 %v627
    %v667 = vunpack.c.l.b16 %v628
    %v668 = vunpack.c.l.b16 %v629
    %v669 = vunpack.c.l.b16 %v630
    %v670 = vpack.c.b16 %v655, %v654
    %v671 = vpack.c.b16 %v657, %v656
    %v672 = vpack.c.b16 %v659, %v658
    %v673 = vpack.c.b16 %v661, %v660
    %v674 = vpack.c.b16 %v663, %v662
    %v675 = vpack.c.b16 %v665, %v664
    %v676 = vpack.c.b16 %v667, %v666
    %v677 = vpack.c.b16 %v669, %v668
    %686 = vmatprep.subr.bf16.mxu0 0
    %687 = vmatpush1.bf16.msra.mxu0 %v670
    %688 = vmatprep.subr.bf16.mxu0 0
    %689 = vmatpush1.bf16.msra.mxu0 %v671
    %690 = vmatprep.subr.bf16.mxu0 0
    %691 = vmatpush1.bf16.msra.mxu0 %v672
    %692 = vmatprep.subr.bf16.mxu0 0
    %693 = vmatpush1.bf16.msra.mxu0 %v673
    %694 = vmatprep.subr.bf16.mxu0 0
    %695 = vmatpush1.bf16.msra.mxu0 %v674
    %696 = vmatprep.subr.bf16.mxu0 0
    %697 = vmatpush1.bf16.msra.mxu0 %v675
    %698 = vmatprep.subr.bf16.mxu0 0
    %699 = vmatpush1.bf16.msra.mxu0 %v676
    %700 = vmatprep.subr.bf16.mxu0 0
    %701 = vmatpush1.bf16.msra.mxu0 %v677
    %702 = vmatprep.subr.bf16.mxu0 0
    %703 = vmatpush1.bf16.msra.mxu0 0
    %704 = vmatprep.subr.bf16.mxu0 0
    %705 = vmatpush1.bf16.msra.mxu0 0
    %706 = vmatprep.subr.bf16.mxu0 0
    %707 = vmatpush1.bf16.msra.mxu0 0
    %708 = vmatprep.subr.bf16.mxu0 0
    %709 = vmatpush1.bf16.msra.mxu0 0
    %710 = vmatprep.subr.bf16.mxu0 0
    %711 = vmatpush1.bf16.msra.mxu0 0
    %712 = vmatprep.subr.bf16.mxu0 0
    %713 = vmatpush1.bf16.msra.mxu0 0
    %714 = vmatprep.subr.bf16.mxu0 0
    %715 = vmatpush1.bf16.msra.mxu0 0
    %716 = vmatprep.subr.bf16.mxu0 0
    %717 = vmatpush1.bf16.msra.mxu0 0
    %718 = vmatprep.mubr.bf16.mxu0 0
    %719 = vmatmul.mubr.bf16.gmra.mrb[0].mxu0 %v614
    %v720 = vpop.f32.mrb[0].mxu0
    %v721 = vadd.f32 %v636, %v720
    %v722 = vpop.f32.mrb[0].mxu0
    %v723 = vpop.f32.mrb[0].mxu0
    %v724 = vpop.f32.mrb[0].mxu0
    %725 = vdwg.mxu0
    %v726 = vpack.c.bf16 %v721, %v721
    %vm727 = vcmask 257024
    %728 = vst.msk [vmem:[#allocation7] sm:$0xf] %vm727, %v726
    // Predicated region
    $region38: #{player_embedder_forward.1} parent=1 // pred_check
      _
    $region39: #{player_embedder_forward.1} parent=1 // pred_check_branch
      %730 = sbr.rel (0) target = $region41
    $region40: #{player_embedder_forward.1} parent=1 // pred_region
      %s732 = ssub.s32 64, 64
      %733 = vsyncadd [#allocation4], %s732
      %s735 = sshll.u32 [#allocation7], 4
      %s736 = int_to_ptr.vmem [resolvable:$true] %s735
      %738 = dma.vmem_to_hbm [thread:$0]  %s736, 64, %s7, [#allocation4]
    $region41: #{player_embedder_forward.1} parent=1 // pred_fallthru
      _
    // Predicated region
    $region42: #{player_embedder_forward.1} parent=1 // pred_check
      _
    $region43: #{player_embedder_forward.1} parent=1 // pred_check_branch
      %740 = sbr.rel (0) target = $region45
    $region44: #{player_embedder_forward.1} parent=1 // pred_region
      %741 = dma.done [#allocation4], 64
    $region45: #{player_embedder_forward.1} parent=1 // pred_fallthru
      _
    %742 = vsyncpa [#allocation3], 1
    %743 = vsyncpa [#allocation6], 1
    %744 = vsyncpa [#allocation4], 1

</llo_original>
